<compile_context>
chip_gen: v7x
topology: tpu7x:2x2x1
jax: 0.10.0
libtpu: 0.0.40
codegen_flags: <defaults>
</compile_context>

<pallas_src>
import jax
import jax.numpy as jnp
from jax.experimental import pallas as pl
from jax.experimental.pallas import tpu as pltpu

_LANES = 128               # vreg lane width
_SUBLANES = 8              # f32 sublane tile
_TARGET_BLOCK_ROWS = 4096  # 4096 * 128 * 4 B = 2 MiB per buffer (HBM-roofline sweet spot)


def _affine_kernel(w_ref, b_ref, x_ref, o_ref):
    # Pure VPU affine: y = x * w + b. w/b are SMEM scalars; x/o are lane-dense tiles.
    o_ref[...] = x_ref[...] * w_ref[0] + b_ref[0]


def _choose_block_rows(rows):
    """Pick a sublane-aligned row-block size.

    - Small inputs: one full-array block (block == array dim is always legal).
    - Large inputs: at most rows//4 (rounded to a sublane multiple) so the
      "parallel" grid has >= 4 steps for v7x's two TensorCores, capped at
      _TARGET_BLOCK_ROWS (2 MiB/buffer f32).
    """
    if rows <= _SUBLANES:
        return rows
    quarter = max(_SUBLANES, ((rows // 4) // _SUBLANES) * _SUBLANES)
    return max(_SUBLANES, min(_TARGET_BLOCK_ROWS, quarter))


def _run_affine(x2d, w_s, b_s):
    """Run y = x * w + b over a lane-dense (rows, 128) f32 slab."""
    rows, lanes = x2d.shape
    block_rows = _choose_block_rows(rows)
    grid = (pl.cdiv(rows, block_rows),)
    bytes_accessed = 2 * rows * lanes * x2d.dtype.itemsize  # read x + write y

    return pl.pallas_call(
        _affine_kernel,
        out_shape=jax.ShapeDtypeStruct((rows, lanes), x2d.dtype),
        grid=grid,
        in_specs=[
            pl.BlockSpec(memory_space=pltpu.MemorySpace.SMEM),  # weight scalar
            pl.BlockSpec(memory_space=pltpu.MemorySpace.SMEM),  # bias scalar
            pl.BlockSpec((block_rows, lanes), lambda i: (i, 0)),
        ],
        out_specs=pl.BlockSpec((block_rows, lanes), lambda i: (i, 0)),
        compiler_params=pltpu.CompilerParams(
            dimension_semantics=("parallel",),  # shard row-blocks across TensorCores
        ),
        cost_estimate=pl.CostEstimate(
            flops=2 * rows * lanes,
            transcendentals=0,
            bytes_accessed=bytes_accessed,
        ),
    )(w_s, b_s, x2d)


def linear_forward(x, w, b):
    """nn.Linear(1, 1) forward: y = x @ W^T + b, i.e. y = x * w[0,0] + b[0].

    x: (B, 1) f32, w: (1, 1) f32, b: (1,) f32  ->  (B, 1) f32
    """
    B, IN = x.shape
    OUT, IN_w = w.shape
    assert IN == 1 and OUT == 1 and IN_w == 1, "this kernel mirrors nn.Linear(1, 1)"

    dtype = x.dtype
    w_s = w.reshape(1).astype(dtype)  # SMEM scalar
    b_s = b.reshape(1).astype(dtype)  # SMEM scalar
    x_flat = x.reshape(-1)            # (B,)

    if B % _LANES == 0:
        # Fast path: lane-dense reshape only — no pad, no output slice,
        # no extra HBM round-trips around the memory-bound kernel.
        rows = B // _LANES
        y2d = _run_affine(x_flat.reshape(rows, _LANES), w_s, b_s)
        return y2d.reshape(B, OUT)

    # Ragged batch: pad only up to the next whole 128-lane row (<= 127 extra
    # elements). The ragged last *block* (rows % block_rows != 0) is masked by
    # Pallas itself, so no block-level padding is needed.
    rows = pl.cdiv(B, _LANES)
    padded = rows * _LANES
    x_pad = jnp.zeros((padded,), dtype).at[:B].set(x_flat).reshape(rows, _LANES)
    y2d = _run_affine(x_pad, w_s, b_s)
    return y2d.reshape(-1)[:B].reshape(B, OUT)


class Model:
    """JAX mirror of the PyTorch Model: self.linear = nn.Linear(1, 1)."""

    def __init__(self, key):
        in_features, out_features = 1, 1
        kw, kb = jax.random.split(key)
        # PyTorch-style init: U(-1/sqrt(fan_in), 1/sqrt(fan_in)).
        bound = 1.0 / (in_features ** 0.5)
        self.weight = jax.random.uniform(
            kw, (out_features, in_features), jnp.float32, -bound, bound
        )
        self.bias = jax.random.uniform(
            kb, (out_features,), jnp.float32, -bound, bound
        )

    def __call__(self, x):
        return linear_forward(x, self.weight, self.bias)


if __name__ == "__main__":
    key = jax.random.PRNGKey(0)
    k_model, k_x1, k_x2 = jax.random.split(key, 3)

    model = Model(k_model)

    # 1) Ragged-batch path (matches the module's hour_var = [[4.0]] usage).
    x_rand = jax.random.normal(k_x1, (1, 1), jnp.float32)
    hour_var = jnp.array([[4.0]], dtype=jnp.float32)
    x_small = jnp.concatenate([hour_var, x_rand], axis=0)  # (2, 1)

    y_small = model(x_small)
    jax.block_until_ready(y_small)
    y_small_ref = x_small @ model.weight.T + model.bias
    assert y_small.shape == y_small_ref.shape, (y_small.shape, y_small_ref.shape)
    assert jnp.allclose(y_small, y_small_ref, atol=1e-6), (y_small, y_small_ref)

    # 2) Lane-aligned fast path (no pad / no slice), still small.
    x_big = jax.random.normal(k_x2, (256, 1), jnp.float32)
    y_big = model(x_big)
    jax.block_until_ready(y_big)
    y_big_ref = x_big @ model.weight.T + model.bias
    assert y_big.shape == y_big_ref.shape, (y_big.shape, y_big_ref.shape)
    assert jnp.allclose(y_big, y_big_ref, atol=1e-6)

    print("KERNEL_OK")
</pallas_src>

<mosaic_0001>
module attributes {stable_mosaic.version = 11 : i64} {
  func.func @_affine_kernel(%arg0: i32, %arg1: memref<1xf32, #tpu.memory_space<smem>>, %arg2: memref<1xf32, #tpu.memory_space<smem>>, %arg3: memref<1x128xf32, #tpu.memory_space<vmem>>, %arg4: memref<1x128xf32, #tpu.memory_space<vmem>>) attributes {dimension_semantics = [#tpu.dimension_semantics<parallel>], iteration_bounds = array<i64: 1>, scalar_prefetch = 0 : i64, scratch_operands = 0 : i64, tpu.core_type = #tpu.core_type<tc>, window_params = [{transform_indices = @transform_0, window_bounds = array<i64: 1>}, {transform_indices = @transform_1, window_bounds = array<i64: 1>}, {transform_indices = @transform_2, window_bounds = array<i64: 1, 128>}, {transform_indices = @transform_3, window_bounds = array<i64: 1, 128>}]} {
    %c0 = arith.constant 0 : index
    %c0_0 = arith.constant 0 : index
    %0 = vector.load %arg3[%c0, %c0_0] : memref<1x128xf32, #tpu.memory_space<vmem>>, vector<1x128xf32>
    %c0_1 = arith.constant 0 : index
    %1 = memref.load %arg1[%c0_1] : memref<1xf32, #tpu.memory_space<smem>>
    %2 = vector.broadcast %1 : f32 to vector<1x128xf32>
    %3 = arith.mulf %0, %2 : vector<1x128xf32>
    %c0_2 = arith.constant 0 : index
    %4 = memref.load %arg2[%c0_2] : memref<1xf32, #tpu.memory_space<smem>>
    %5 = vector.broadcast %4 : f32 to vector<1x128xf32>
    %6 = arith.addf %3, %5 : vector<1x128xf32>
    %c0_3 = arith.constant 0 : index
    %c0_4 = arith.constant 0 : index
    %7 = vector.load %arg4[%c0_3, %c0_4] : memref<1x128xf32, #tpu.memory_space<vmem>>, vector<1x128xf32>
    tpu.vector_store %arg4[%c0_3, %c0_4], %6 {strides = array<i32>} : memref<1x128xf32, #tpu.memory_space<vmem>>, vector<1x128xf32>,
    return
  }
  func.func @transform_0(%arg0: i32) -> i32 {
    %c0_i32 = arith.constant 0 : i32
    %c0_i32_0 = arith.constant 0 : i32
    return %c0_i32 : i32
  }
  func.func @transform_1(%arg0: i32) -> i32 {
    %c0_i32 = arith.constant 0 : i32
    %c0_i32_0 = arith.constant 0 : i32
    return %c0_i32 : i32
  }
  func.func @transform_2(%arg0: i32) -> (i32, i32) {
    %c0_i32 = arith.constant 0 : i32
    %c0_i32_0 = arith.constant 0 : i32
    return %arg0, %c0_i32 : i32, i32
  }
  func.func @transform_3(%arg0: i32) -> (i32, i32) {
    %c0_i32 = arith.constant 0 : i32
    %c0_i32_0 = arith.constant 0 : i32
    return %arg0, %c0_i32 : i32, i32
  }
}

</mosaic_0001>

<llo_original>
// kernel: tpu_custom_call.1
$region0: #{tpu_custom_call.1}
  #allocation0 [shape = 'u32[]', space=smem, size = 0x4, offset = 0x4, fixed_abs, tag = 'smem constant byte address 0x4 - core index']
  #allocation1 [shape = 'u32[144,128]{1,0:T(1,128)}', space=vmem, size = 0x12000, scoped, tag = 'internal scratch']
  #allocation2 [shape = 'f32[1]{0:T(128)S(6)}', space=smem, size = 0x200, scoped, tag = 'scoped memory for tpu_custom_call.1']
  #allocation3 [shape = 'f32[1]{0:T(128)S(6)}', space=smem, size = 0x200, scoped, tag = 'scoped memory for tpu_custom_call.1']
  %s0 = inlined_call_operand.<no memory space> [shape: f32[1], index: 0, kind: input, shape index: {}]
  %s1 = inlined_call_operand.<no memory space> [shape: f32[1], index: 1, kind: input, shape index: {}]
  %s2 = inlined_call_operand.vmem [shape: f32[1,128], index: 2, kind: input, shape index: {}]
  %s3 = inlined_call_operand.hbm [shape: f32[1,128], index: 3, kind: output, shape index: {}]
  %s4 = sld [smem:[#allocation0]]
  $region22: #{tpu_custom_call.1} parent=0
    _
  %s6 = ssub.s32 1, %s4
  %s7 = scalar_select 0, %s6, %s4
  %8 = sst [smem:[#allocation2]] %s0
  %9 = sst [smem:[#allocation3]] %s1
  $region1: #{tpu_custom_call.1} parent=0
    #allocation4 [shape = 'u8[512]{0}', space=vmem, size = 0x400, scoped, tag = 'output window, operand 0, single buffered']
    #allocation5 [shape = 's32[1]{0}', space=sflag, size = 0x4, scoped, tag = 'scoped memory for tpu_custom_call.1']
    %10 = vsyncpa [#allocation5], 0
    // Predicated region
    $region2: #{tpu_custom_call.1} parent=1 // pred_check
      _
    $region3: #{tpu_custom_call.1} parent=1 // pred_check_branch
      %12 = sbr.rel (0) target = $region5
    $region4: #{tpu_custom_call.1} parent=1 // pred_region
      _
    $region5: #{tpu_custom_call.1} parent=1 // pred_fallthru
      _
    // Predicated region
    $region6: #{tpu_custom_call.1} parent=1 // pred_check
      _
    $region7: #{tpu_custom_call.1} parent=1 // pred_check_branch
      %14 = sbr.rel (0) target = $region9
    $region8: #{tpu_custom_call.1} parent=1 // pred_region
      _
    $region9: #{tpu_custom_call.1} parent=1 // pred_fallthru
      _
    // Predicated region
    $region10: #{tpu_custom_call.1} parent=1 // pred_check
      _
    $region11: #{tpu_custom_call.1} parent=1 // pred_check_branch
      %16 = sbr.rel (0) target = $region13
    $region12: #{tpu_custom_call.1} parent=1 // pred_region
      _
    $region13: #{tpu_custom_call.1} parent=1 // pred_fallthru
      _
    %v17 = vld [vmem:[%s2] sm:$0x1]
    %s18 = sld [smem:[#allocation2]]
    %v19 = vstv %s18
    %v20 = vmul.f32 %v17, %v19
    %s21 = sld [smem:[#allocation3]]
    %v22 = vstv %s21
    %v23 = vadd.f32 %v20, %v22
    %24 = vst [vmem:[#allocation4] sm:$0x1] %v23
    // Predicated region
    $region14: #{tpu_custom_call.1} parent=1 // pred_check
      _
    $region15: #{tpu_custom_call.1} parent=1 // pred_check_branch
      %26 = sbr.rel (0) target = $region17
    $region16: #{tpu_custom_call.1} parent=1 // pred_region
      %s28 = ssub.s32 16, 16
      %29 = vsyncadd [#allocation5], %s28
      %s31 = sshll.u32 [#allocation4], 4
      %s32 = int_to_ptr.vmem [resolvable:$true] %s31
      %34 = dma.vmem_to_hbm [thread:$0]  %s32, 16, %s3, [#allocation5]
    $region17: #{tpu_custom_call.1} parent=1 // pred_fallthru
      _
    // Predicated region
    $region18: #{tpu_custom_call.1} parent=1 // pred_check
      _
    $region19: #{tpu_custom_call.1} parent=1 // pred_check_branch
      %36 = sbr.rel (0) target = $region21
    $region20: #{tpu_custom_call.1} parent=1 // pred_region
      %37 = dma.done [#allocation5], 16
    $region21: #{tpu_custom_call.1} parent=1 // pred_fallthru
      _
    %38 = vsyncpa [#allocation5], 1

</llo_original>
